<compile_context>
chip_gen: v7x
topology: tpu7x:2x2x1
jax: 0.10.0
libtpu: 0.0.40
codegen_flags: <defaults>
</compile_context>

<pallas_src>
import functools

import jax
import jax.numpy as jnp
from jax.experimental import pallas as pl
from jax.experimental.pallas import tpu as pltpu


# --------------------------------------------------------------------------
# Pallas kernels
# --------------------------------------------------------------------------
def _gelu(z):
    # tanh-approx GELU (HF BERT uses erf GELU; fine for synthetic weights)
    return 0.5 * z * (1.0 + jnp.tanh(0.7978845608028654 *
                                     (z + 0.044715 * z * z * z)))


def _linear_kernel(x_ref, w_ref, b_ref, o_ref, *, activation):
    """Single-K-tile x @ w + b (optionally fused GELU). No accumulator scratch."""
    z = jnp.dot(x_ref[...].astype(jnp.bfloat16), w_ref[...],
                preferred_element_type=jnp.float32)
    z = z + b_ref[...]
    if activation == "gelu":
        z = _gelu(z)
    o_ref[...] = z.astype(o_ref.dtype)


def linear(x, w, b, *, activation=None, tn=768):
    """x:[M,K] f32 @ w:[K,N] bf16 + b:[N] f32.  K in one tile; N tiled (parallel)."""
    M, K = x.shape
    _, N = w.shape
    tn = min(tn, N)
    assert N % tn == 0
    kern = functools.partial(_linear_kernel, activation=activation)
    return pl.pallas_call(
        kern,
        out_shape=jax.ShapeDtypeStruct((M, N), jnp.float32),
        grid_spec=pltpu.PrefetchScalarGridSpec(
            num_scalar_prefetch=0,
            grid=(N // tn,),
            in_specs=[
                pl.BlockSpec((M, K), lambda j: (0, 0)),
                pl.BlockSpec((K, tn), lambda j: (0, j)),
                pl.BlockSpec((1, tn), lambda j: (0, j)),
            ],
            out_specs=pl.BlockSpec((M, tn), lambda j: (0, j)),
        ),
        compiler_params=pltpu.CompilerParams(
            dimension_semantics=("parallel",)),
    )(x, w, b.reshape(1, N))


def _linear_res_ln_kernel(x_ref, w_ref, b_ref, r_ref, g_ref, be_ref, o_ref):
    """x @ w + b + residual, then LayerNorm — all fused, f32 epilogue math."""
    z = jnp.dot(x_ref[...].astype(jnp.bfloat16), w_ref[...],
                preferred_element_type=jnp.float32)
    z = z + b_ref[...] + r_ref[...]
    mean = jnp.mean(z, axis=-1, keepdims=True)
    zc = z - mean
    var = jnp.mean(zc * zc, axis=-1, keepdims=True)
    inv = jax.lax.rsqrt(var + 1e-12)
    o_ref[...] = (zc * inv * g_ref[...] + be_ref[...]).astype(o_ref.dtype)


def linear_residual_layernorm(x, w, b, residual, gamma, beta):
    """x:[M,K] f32, w:[K,N] bf16 (N==hidden, one tile so LN sees the full row)."""
    M, K = x.shape
    N = w.shape[1]
    return pl.pallas_call(
        _linear_res_ln_kernel,
        out_shape=jax.ShapeDtypeStruct((M, N), jnp.float32),
    )(x, w, b.reshape(1, N), residual, gamma.reshape(1, N), beta.reshape(1, N))


def _layernorm_kernel(x_ref, g_ref, b_ref, o_ref):
    x = x_ref[...]
    mean = jnp.mean(x, axis=-1, keepdims=True)
    xc = x - mean
    var = jnp.mean(xc * xc, axis=-1, keepdims=True)
    inv = jax.lax.rsqrt(var + 1e-12)
    o_ref[...] = xc * inv * g_ref[...] + b_ref[...]


def layer_norm(x, gamma, beta):
    M, H = x.shape
    return pl.pallas_call(
        _layernorm_kernel,
        out_shape=jax.ShapeDtypeStruct((M, H), jnp.float32),
    )(x, gamma.reshape(1, H), beta.reshape(1, H))


def _attention_kernel(q_ref, k_ref, v_ref, o_ref, *, scale):
    """All heads of one batch element per step: (nh, S, D) batched matmuls."""
    q = q_ref[...].astype(jnp.bfloat16)          # (nh, S, D)
    k = k_ref[...].astype(jnp.bfloat16)
    v = v_ref[...].astype(jnp.bfloat16)
    s = jax.lax.dot_general(q, k, (((2,), (2,)), ((0,), (0,))),
                            preferred_element_type=jnp.float32) * scale  # (nh,S,S)
    s = s - jnp.max(s, axis=-1, keepdims=True)
    p = jnp.exp(s)
    p = p / jnp.sum(p, axis=-1, keepdims=True)
    o_ref[...] = jax.lax.dot_general(
        p.astype(jnp.bfloat16), v, (((2,), (1,)), ((0,), (0,))),
        preferred_element_type=jnp.float32).astype(o_ref.dtype)


def attention(q, k, v, *, n_heads):
    """q, k, v: [B*heads, S, head_dim]; full (no-mask) self-attention."""
    BH, S, D = q.shape
    B = BH // n_heads
    scale = 1.0 / float(D) ** 0.5
    kern = functools.partial(_attention_kernel, scale=scale)
    spec = pl.BlockSpec((n_heads, S, D), lambda b: (b, 0, 0))
    return pl.pallas_call(
        kern,
        out_shape=jax.ShapeDtypeStruct((BH, S, D), jnp.float32),
        grid_spec=pltpu.PrefetchScalarGridSpec(
            num_scalar_prefetch=0,
            grid=(B,),
            in_specs=[spec, spec, spec],
            out_specs=spec,
        ),
        compiler_params=pltpu.CompilerParams(
            dimension_semantics=("parallel",)),
    )(q, k, v)


def _head_kernel(x_ref, w_ref, b_ref, o_ref):
    z = jnp.dot(x_ref[...].astype(jnp.bfloat16), w_ref[...],
                preferred_element_type=jnp.float32) + b_ref[...]
    z = jnp.maximum(z, 0.0)                 # ReLU
    # TODO(synk): Dropout(p=0.3) is identity at inference (eval mode); training-mode
    # stochastic dropout (pltpu.prng_*) not implemented.
    o_ref[...] = 1.0 / (1.0 + jnp.exp(-z))  # Sigmoid


def classifier_head(cls, w, b):
    """Linear(768,2)+ReLU+Sigmoid; output padded to 128 lanes (dense stores)."""
    B, H = cls.shape
    N = w.shape[1]
    Np = 128
    w_pad = jnp.zeros((H, Np), w.dtype).at[:, :N].set(w)
    b_pad = jnp.zeros((1, Np), jnp.float32).at[0, :N].set(b)
    out = pl.pallas_call(
        _head_kernel,
        out_shape=jax.ShapeDtypeStruct((B, Np), jnp.float32),
    )(cls, w_pad, b_pad)
    return out[:, :N]


# --------------------------------------------------------------------------
# Parameters (deterministic synthetic init; no checkpoint load)
# --------------------------------------------------------------------------
def init_params(key, *, vocab=128, max_pos=16, type_vocab=2,
                hidden=768, n_layers=2, n_heads=12, ffn=3072):
    def nrm(k, shape, dtype=jnp.bfloat16):
        return (0.02 * jax.random.normal(k, shape, jnp.float32)).astype(dtype)

    keys = jax.random.split(key, 4 + n_layers)
    params = {
        "word_emb": nrm(keys[0], (vocab, hidden), jnp.float32),
        "pos_emb":  nrm(keys[1], (max_pos, hidden), jnp.float32),
        "type_emb": nrm(keys[2], (type_vocab, hidden), jnp.float32),
        "emb_ln_g": jnp.ones((hidden,), jnp.float32),
        "emb_ln_b": jnp.zeros((hidden,), jnp.float32),
        "n_heads":  n_heads,
        "layers":   [],
    }
    for i in range(n_layers):
        lk = jax.random.split(keys[4 + i], 6)
        wq = nrm(lk[0], (hidden, hidden))
        wk = nrm(lk[1], (hidden, hidden))
        wv = nrm(lk[2], (hidden, hidden))
        params["layers"].append({
            # fused QKV projection: [H, 3H] bf16 weight, f32 bias
            "w_qkv": jnp.concatenate([wq, wk, wv], axis=1),
            "b_qkv": jnp.zeros((3 * hidden,), jnp.float32),
            "wo": nrm(lk[3], (hidden, hidden)),
            "bo": jnp.zeros((hidden,), jnp.float32),
            "ln1_g": jnp.ones((hidden,), jnp.float32),
            "ln1_b": jnp.zeros((hidden,), jnp.float32),
            "w1": nrm(lk[4], (hidden, ffn)),
            "b1": jnp.zeros((ffn,), jnp.float32),
            "w2": nrm(lk[5], (ffn, hidden)),
            "b2": jnp.zeros((hidden,), jnp.float32),
            "ln2_g": jnp.ones((hidden,), jnp.float32),
            "ln2_b": jnp.zeros((hidden,), jnp.float32),
        })
    hk = jax.random.split(keys[3], 2)
    params["wc"] = nrm(hk[0], (hidden, 2))   # torch.nn.Linear(768, 2)
    params["bc"] = jnp.zeros((2,), jnp.float32)
    return params


# --------------------------------------------------------------------------
# Forward pass (mirrors CustomBERTModel.forward)
# --------------------------------------------------------------------------
def custom_bert_forward(params, input_ids):
    B, S = input_ids.shape
    H = params["word_emb"].shape[1]
    nh = params["n_heads"]
    dh = H // nh

    # BERT embeddings (gather is glue; LayerNorm is a Pallas kernel)
    x = (params["word_emb"][input_ids]
         + params["pos_emb"][:S][None, :, :]
         + params["type_emb"][0][None, None, :])
    x = x.reshape(B * S, H)
    x = layer_norm(x, params["emb_ln_g"], params["emb_ln_b"])

    def split_heads(t):
        return t.reshape(B, S, nh, dh).transpose(0, 2, 1, 3).reshape(B * nh, S, dh)

    def merge_heads(t):
        return t.reshape(B, nh, S, dh).transpose(0, 2, 1, 3).reshape(B * S, H)

    for lyr in params["layers"]:
        # fused QKV projection: one pallas_call, N tiled over grid=(3,) "parallel"
        qkv = linear(x, lyr["w_qkv"], lyr["b_qkv"], tn=H)
        q, k, v = qkv[:, :H], qkv[:, H:2 * H], qkv[:, 2 * H:]
        ctx = attention(split_heads(q), split_heads(k), split_heads(v), n_heads=nh)
        # attention output proj + bias + residual + LayerNorm fused
        x = linear_residual_layernorm(merge_heads(ctx), lyr["wo"], lyr["bo"],
                                      x, lyr["ln1_g"], lyr["ln1_b"])
        # FFN up-projection + GELU (N tiled over grid=(4,) "parallel")
        h = linear(x, lyr["w1"], lyr["b1"], activation="gelu", tn=H)
        # FFN down-projection + bias + residual + LayerNorm fused (K=3072 single bf16 tile)
        x = linear_residual_layernorm(h, lyr["w2"], lyr["b2"],
                                      x, lyr["ln2_g"], lyr["ln2_b"])

    last_hidden = x.reshape(B, S, H)        # outputs[0]
    cls = last_hidden[:, 0, :]              # [:, 0, :]
    # Linear(768,2) -> ReLU -> Dropout(identity, eval) -> Sigmoid, fused in one kernel
    return classifier_head(cls, params["wc"], params["bc"])


# --------------------------------------------------------------------------
if __name__ == "__main__":
    key = jax.random.PRNGKey(0)
    k_params, k_ids = jax.random.split(key)

    B, S, VOCAB = 2, 8, 128
    params = init_params(k_params, vocab=VOCAB, max_pos=16, hidden=768,
                         n_layers=2, n_heads=12, ffn=3072)
    input_ids = jax.random.randint(k_ids, (B, S), 0, VOCAB, dtype=jnp.int32)

    out = custom_bert_forward(params, input_ids)
    out = jax.block_until_ready(out)

    assert out.shape == (B, 2), out.shape
    assert bool(jnp.all(jnp.isfinite(out)))
    assert bool(jnp.all((out >= 0.0) & (out <= 1.0)))   # sigmoid range
    print("KERNEL_OK")
</pallas_src>

<mosaic_0001>
module attributes {stable_mosaic.version = 11 : i64} {
  func.func @_layernorm_kernel(%arg0: memref<16x768xf32, #tpu.memory_space<vmem>>, %arg1: memref<1x768xf32, #tpu.memory_space<vmem>>, %arg2: memref<1x768xf32, #tpu.memory_space<vmem>>, %arg3: memref<16x768xf32, #tpu.memory_space<vmem>>) attributes {dimension_semantics = [], scalar_prefetch = 0 : i64, scratch_operands = 0 : i64, tpu.core_type = #tpu.core_type<tc>} {
    %c0 = arith.constant 0 : index
    %c0_0 = arith.constant 0 : index
    %0 = vector.load %arg0[%c0, %c0_0] : memref<16x768xf32, #tpu.memory_space<vmem>>, vector<16x768xf32>
    %cst = arith.constant dense<0.000000e+00> : vector<16xf32>
    %1 = vector.multi_reduction <add>, %0, %cst [1] : vector<16x768xf32> to vector<16xf32>
    %2 = vector.shape_cast %1 : vector<16xf32> to vector<16x1xf32>
    %cst_1 = arith.constant 7.680000e+02 : f32
    %3 = vector.broadcast %cst_1 : f32 to vector<16x1xf32>
    %4 = arith.divf %2, %3 : vector<16x1xf32>
    %5 = vector.broadcast %4 : vector<16x1xf32> to vector<16x768xf32>
    %6 = arith.subf %0, %5 : vector<16x768xf32>
    %7 = arith.mulf %6, %6 : vector<16x768xf32>
    %cst_2 = arith.constant dense<0.000000e+00> : vector<16xf32>
    %8 = vector.multi_reduction <add>, %7, %cst_2 [1] : vector<16x768xf32> to vector<16xf32>
    %9 = vector.shape_cast %8 : vector<16xf32> to vector<16x1xf32>
    %cst_3 = arith.constant 7.680000e+02 : f32
    %10 = vector.broadcast %cst_3 : f32 to vector<16x1xf32>
    %11 = arith.divf %9, %10 : vector<16x1xf32>
    %cst_4 = arith.constant 9.99999996E-13 : f32
    %12 = vector.broadcast %cst_4 : f32 to vector<16x1xf32>
    %13 = arith.addf %11, %12 : vector<16x1xf32>
    %14 = math.rsqrt %13 : vector<16x1xf32>
    %15 = vector.broadcast %14 : vector<16x1xf32> to vector<16x768xf32>
    %16 = arith.mulf %6, %15 : vector<16x768xf32>
    %c0_5 = arith.constant 0 : index
    %c0_6 = arith.constant 0 : index
    %17 = vector.load %arg1[%c0_5, %c0_6] : memref<1x768xf32, #tpu.memory_space<vmem>>, vector<1x768xf32>
    %18 = vector.broadcast %17 : vector<1x768xf32> to vector<16x768xf32>
    %19 = arith.mulf %16, %18 : vector<16x768xf32>
    %c0_7 = arith.constant 0 : index
    %c0_8 = arith.constant 0 : index
    %20 = vector.load %arg2[%c0_7, %c0_8] : memref<1x768xf32, #tpu.memory_space<vmem>>, vector<1x768xf32>
    %21 = vector.broadcast %20 : vector<1x768xf32> to vector<16x768xf32>
    %22 = arith.addf %19, %21 : vector<16x768xf32>
    %c0_9 = arith.constant 0 : index
    %c0_10 = arith.constant 0 : index
    %23 = vector.load %arg3[%c0_9, %c0_10] : memref<16x768xf32, #tpu.memory_space<vmem>>, vector<16x768xf32>
    tpu.vector_store %arg3[%c0_9, %c0_10], %22 {strides = array<i32>} : memref<16x768xf32, #tpu.memory_space<vmem>>, vector<16x768xf32>,
    return
  }
}

</mosaic_0001>

<llo_original>
// kernel: tpu_custom_call.1
$region0: #{tpu_custom_call.1}
  #allocation0 [shape = 'u32[]', space=smem, size = 0x4, offset = 0x4, fixed_abs, tag = 'smem constant byte address 0x4 - core index']
  #allocation1 [shape = 'u32[144,128]{1,0:T(1,128)}', space=vmem, size = 0x12000, scoped, tag = 'internal scratch']
  %s0 = inlined_call_operand.hbm [shape: f32[16,768], index: 0, kind: input, shape index: {}]
  %s1 = inlined_call_operand.hbm [shape: f32[1,768], index: 1, kind: input, shape index: {}]
  %s2 = inlined_call_operand.vmem [shape: f32[1,768], index: 2, kind: input, shape index: {}]
  %s3 = inlined_call_operand.hbm [shape: f32[16,768], index: 3, kind: output, shape index: {}]
  %s4 = sld [smem:[#allocation0]]
  $region30: #{tpu_custom_call.1} parent=0
    _
  %s6 = ssub.s32 1, %s4
  %s7 = scalar_select 0, %s6, %s4
  $region1: #{tpu_custom_call.1} parent=0
    #allocation2 [shape = 'u8[49152]{0}', space=vmem, size = 0xc000, scoped, tag = 'input window, operand 0, single buffered']
    #allocation3 [shape = 's32[1]{0}', space=sflag, size = 0x4, scoped, tag = 'scoped memory for tpu_custom_call.1']
    #allocation4 [shape = 's32[1]{0}', space=sflag, size = 0x4, scoped, tag = 'scoped memory for tpu_custom_call.1']
    #allocation5 [shape = 'u8[3072]{0}', space=vmem, size = 0xc00, scoped, tag = 'input window, operand 1, single buffered']
    #allocation6 [shape = 's32[1]{0}', space=sflag, size = 0x4, scoped, tag = 'scoped memory for tpu_custom_call.1']
    #allocation7 [shape = 'u8[49152]{0}', space=vmem, size = 0xc000, scoped, tag = 'output window, operand 0, single buffered']
    %8 = vsyncpa [#allocation3], 0
    %9 = vsyncpa [#allocation6], 0
    %10 = vsyncpa [#allocation4], 0
    // Predicated region
    $region2: #{tpu_custom_call.1} parent=1 // pred_check
      _
    $region3: #{tpu_custom_call.1} parent=1 // pred_check_branch
      %12 = sbr.rel (0) target = $region5
    $region4: #{tpu_custom_call.1} parent=1 // pred_region
      %s14 = ssub.s32 1536, 1536
      %15 = vsyncadd [#allocation3], %s14
      %s16 = sshll.u32 [#allocation2], 4
      %s17 = int_to_ptr.vmem [resolvable:$true] %s16
      %22 = dma.hbm_to_vmem [thread:$0]  %s0, 1536, %s17, [#allocation3], 768, 768, 48
    $region5: #{tpu_custom_call.1} parent=1 // pred_fallthru
      _
    // Predicated region
    $region6: #{tpu_custom_call.1} parent=1 // pred_check
      _
    $region7: #{tpu_custom_call.1} parent=1 // pred_check_branch
      %24 = sbr.rel (0) target = $region9
    $region8: #{tpu_custom_call.1} parent=1 // pred_region
      %s26 = ssub.s32 96, 96
      %27 = vsyncadd [#allocation6], %s26
      %s29 = sshll.u32 [#allocation5], 4
      %s30 = int_to_ptr.vmem [resolvable:$true] %s29
      %32 = dma.hbm_to_vmem [thread:$0]  %s1, 96, %s30, [#allocation6]
    $region9: #{tpu_custom_call.1} parent=1 // pred_fallthru
      _
    // Predicated region
    $region10: #{tpu_custom_call.1} parent=1 // pred_check
      _
    $region11: #{tpu_custom_call.1} parent=1 // pred_check_branch
      %34 = sbr.rel (0) target = $region13
    $region12: #{tpu_custom_call.1} parent=1 // pred_region
      _
    $region13: #{tpu_custom_call.1} parent=1 // pred_fallthru
      _
    // Predicated region
    $region14: #{tpu_custom_call.1} parent=1 // pred_check
      _
    $region15: #{tpu_custom_call.1} parent=1 // pred_check_branch
      %36 = sbr.rel (0) target = $region17
    $region16: #{tpu_custom_call.1} parent=1 // pred_region
      %37 = dma.done [#allocation3], 1536
    $region17: #{tpu_custom_call.1} parent=1 // pred_fallthru
      _
    // Predicated region
    $region18: #{tpu_custom_call.1} parent=1 // pred_check
      _
    $region19: #{tpu_custom_call.1} parent=1 // pred_check_branch
      %39 = sbr.rel (0) target = $region21
    $region20: #{tpu_custom_call.1} parent=1 // pred_region
      %40 = dma.done [#allocation6], 96
    $region21: #{tpu_custom_call.1} parent=1 // pred_fallthru
      _
    %v41 = vld [vmem:[#allocation2] sm:$0xff]
    %v42 = vld [vmem:[#allocation2 + $0x8] sm:$0xff]
    %v43 = vld [vmem:[#allocation2 + $0x10] sm:$0xff]
    %v44 = vld [vmem:[#allocation2 + $0x18] sm:$0xff]
    %v45 = vld [vmem:[#allocation2 + $0x20] sm:$0xff]
    %v46 = vld [vmem:[#allocation2 + $0x28] sm:$0xff]
    %v47 = vld [vmem:[#allocation2 + $0x30] sm:$0xff]
    %v48 = vld [vmem:[#allocation2 + $0x38] sm:$0xff]
    %v49 = vld [vmem:[#allocation2 + $0x40] sm:$0xff]
    %v50 = vld [vmem:[#allocation2 + $0x48] sm:$0xff]
    %v51 = vld [vmem:[#allocation2 + $0x50] sm:$0xff]
    %v52 = vld [vmem:[#allocation2 + $0x58] sm:$0xff]
    %v53 = vadd.f32 %v41, %v42
    %v54 = vadd.f32 %v53, %v43
    %v55 = vadd.f32 %v54, %v44
    %v56 = vadd.f32 %v55, %v45
    %v57 = vadd.f32 %v56, %v46
    %58 = vadd.xlane.f32.xlu0 %v57
    %v59 = vpop.xlane.xlu0 %58
    %v60 = vadd.f32 %v47, %v48
    %v61 = vadd.f32 %v60, %v49
    %v62 = vadd.f32 %v61, %v50
    %v63 = vadd.f32 %v62, %v51
    %v64 = vadd.f32 %v63, %v52
    %65 = vadd.xlane.f32.xlu0 %v64
    %v66 = vpop.xlane.xlu0 %65
    %v67 = vrcp.pop 768.0
    %v68 = vmul.f32 %v59, %v67
    %v69 = vmul.f32 %v66, %v67
    %v70 = vsub.f32 %v41, %v68
    %v71 = vsub.f32 %v42, %v68
    %v72 = vsub.f32 %v43, %v68
    %v73 = vsub.f32 %v44, %v68
    %v74 = vsub.f32 %v45, %v68
    %v75 = vsub.f32 %v46, %v68
    %v76 = vsub.f32 %v47, %v69
    %v77 = vsub.f32 %v48, %v69
    %v78 = vsub.f32 %v49, %v69
    %v79 = vsub.f32 %v50, %v69
    %v80 = vsub.f32 %v51, %v69
    %v81 = vsub.f32 %v52, %v69
    %v82 = vmul.f32 %v70, %v70
    %v83 = vmul.f32 %v71, %v71
    %v84 = vmul.f32 %v72, %v72
    %v85 = vmul.f32 %v73, %v73
    %v86 = vmul.f32 %v74, %v74
    %v87 = vmul.f32 %v75, %v75
    %v88 = vmul.f32 %v76, %v76
    %v89 = vmul.f32 %v77, %v77
    %v90 = vmul.f32 %v78, %v78
    %v91 = vmul.f32 %v79, %v79
    %v92 = vmul.f32 %v80, %v80
    %v93 = vmul.f32 %v81, %v81
    %v94 = vadd.f32 %v82, %v83
    %v95 = vadd.f32 %v94, %v84
    %v96 = vadd.f32 %v95, %v85
    %v97 = vadd.f32 %v96, %v86
    %v98 = vadd.f32 %v97, %v87
    %99 = vadd.xlane.f32.xlu0 %v98
    %v100 = vpop.xlane.xlu0 %99
    %v101 = vadd.f32 %v88, %v89
    %v102 = vadd.f32 %v101, %v90
    %v103 = vadd.f32 %v102, %v91
    %v104 = vadd.f32 %v103, %v92
    %v105 = vadd.f32 %v104, %v93
    %106 = vadd.xlane.f32.xlu0 %v105
    %v107 = vpop.xlane.xlu0 %106
    %v108 = vmul.f32 %v100, %v67
    %v109 = vmul.f32 %v107, %v67
    %v110 = vadd.f32 %v108, 1e-12
    %v111 = vadd.f32 %v109, 1e-12
    %v112 = vrsqrt.pop %v110
    %v113 = vrsqrt.pop %v111
    %v114 = vmul.f32 %v70, %v112
    %v115 = vmul.f32 %v71, %v112
    %v116 = vmul.f32 %v72, %v112
    %v117 = vmul.f32 %v73, %v112
    %v118 = vmul.f32 %v74, %v112
    %v119 = vmul.f32 %v75, %v112
    %v120 = vmul.f32 %v76, %v113
    %v121 = vmul.f32 %v77, %v113
    %v122 = vmul.f32 %v78, %v113
    %v123 = vmul.f32 %v79, %v113
    %v124 = vmul.f32 %v80, %v113
    %v125 = vmul.f32 %v81, %v113
    %v126 = vld [vmem:[#allocation5] sm:$0x3f]
    %v128 = vlaneseq
    %v129 = vshrl.u32 %v128, 7
    %v130 = vsub.s32 0, %v129
    %v131 = vrot.slane %v126, %v130
    %v132 = vlaneseq
    %v133 = vshrl.u32 %v132, 7
    %v134 = vsub.s32 1, %v133
    %v135 = vrot.slane %v126, %v134
    %v136 = vlaneseq
    %v137 = vshrl.u32 %v136, 7
    %v138 = vsub.s32 2, %v137
    %v139 = vrot.slane %v126, %v138
    %v140 = vlaneseq
    %v141 = vshrl.u32 %v140, 7
    %v142 = vsub.s32 3, %v141
    %v143 = vrot.slane %v126, %v142
    %v144 = vlaneseq
    %v145 = vshrl.u32 %v144, 7
    %v146 = vsub.s32 4, %v145
    %v147 = vrot.slane %v126, %v146
    %v148 = vlaneseq
    %v149 = vshrl.u32 %v148, 7
    %v150 = vsub.s32 5, %v149
    %v151 = vrot.slane %v126, %v150
    %v158 = vmul.f32 %v114, %v131
    %v159 = vmul.f32 %v115, %v135
    %v160 = vmul.f32 %v116, %v139
    %v161 = vmul.f32 %v117, %v143
    %v162 = vmul.f32 %v118, %v147
    %v163 = vmul.f32 %v119, %v151
    %v164 = vmul.f32 %v120, %v131
    %v165 = vmul.f32 %v121, %v135
    %v166 = vmul.f32 %v122, %v139
    %v167 = vmul.f32 %v123, %v143
    %v168 = vmul.f32 %v124, %v147
    %v169 = vmul.f32 %v125, %v151
    %v170 = vld [vmem:[%s2] sm:$0x3f]
    %v172 = vlaneseq
    %v173 = vshrl.u32 %v172, 7
    %v174 = vsub.s32 0, %v173
    %v175 = vrot.slane %v170, %v174
    %v176 = vlaneseq
    %v177 = vshrl.u32 %v176, 7
    %v178 = vsub.s32 1, %v177
    %v179 = vrot.slane %v170, %v178
    %v180 = vlaneseq
    %v181 = vshrl.u32 %v180, 7
    %v182 = vsub.s32 2, %v181
    %v183 = vrot.slane %v170, %v182
    %v184 = vlaneseq
    %v185 = vshrl.u32 %v184, 7
    %v186 = vsub.s32 3, %v185
    %v187 = vrot.slane %v170, %v186
    %v188 = vlaneseq
    %v189 = vshrl.u32 %v188, 7
    %v190 = vsub.s32 4, %v189
    %v191 = vrot.slane %v170, %v190
    %v192 = vlaneseq
    %v193 = vshrl.u32 %v192, 7
    %v194 = vsub.s32 5, %v193
    %v195 = vrot.slane %v170, %v194
    %v202 = vadd.f32 %v158, %v175
    %v203 = vadd.f32 %v159, %v179
    %v204 = vadd.f32 %v160, %v183
    %v205 = vadd.f32 %v161, %v187
    %v206 = vadd.f32 %v162, %v191
    %v207 = vadd.f32 %v163, %v195
    %v208 = vadd.f32 %v164, %v175
    %v209 = vadd.f32 %v165, %v179
    %v210 = vadd.f32 %v166, %v183
    %v211 = vadd.f32 %v167, %v187
    %v212 = vadd.f32 %v168, %v191
    %v213 = vadd.f32 %v169, %v195
    %214 = vst [vmem:[#allocation7] sm:$0xff] %v202
    %215 = vst [vmem:[#allocation7 + $0x8] sm:$0xff] %v203
    %216 = vst [vmem:[#allocation7 + $0x10] sm:$0xff] %v204
    %217 = vst [vmem:[#allocation7 + $0x18] sm:$0xff] %v205
    %218 = vst [vmem:[#allocation7 + $0x20] sm:$0xff] %v206
    %219 = vst [vmem:[#allocation7 + $0x28] sm:$0xff] %v207
    %220 = vst [vmem:[#allocation7 + $0x30] sm:$0xff] %v208
    %221 = vst [vmem:[#allocation7 + $0x38] sm:$0xff] %v209
    %222 = vst [vmem:[#allocation7 + $0x40] sm:$0xff] %v210
    %223 = vst [vmem:[#allocation7 + $0x48] sm:$0xff] %v211
    %224 = vst [vmem:[#allocation7 + $0x50] sm:$0xff] %v212
    %225 = vst [vmem:[#allocation7 + $0x58] sm:$0xff] %v213
    // Predicated region
    $region22: #{tpu_custom_call.1} parent=1 // pred_check
      _
    $region23: #{tpu_custom_call.1} parent=1 // pred_check_branch
      %227 = sbr.rel (0) target = $region25
    $region24: #{tpu_custom_call.1} parent=1 // pred_region
      %s229 = ssub.s32 1536, 1536
      %230 = vsyncadd [#allocation4], %s229
      %s231 = sshll.u32 [#allocation7], 4
      %s232 = int_to_ptr.vmem [resolvable:$true] %s231
      %237 = dma.vmem_to_hbm [thread:$0]  %s232, 1536, %s3, [#allocation4], 768, 768, 48
    $region25: #{tpu_custom_call.1} parent=1 // pred_fallthru
      _
    // Predicated region
    $region26: #{tpu_custom_call.1} parent=1 // pred_check
      _
    $region27: #{tpu_custom_call.1} parent=1 // pred_check_branch
      %239 = sbr.rel (0) target = $region29
    $region28: #{tpu_custom_call.1} parent=1 // pred_region
      %240 = dma.done [#allocation4], 1536
    $region29: #{tpu_custom_call.1} parent=1 // pred_fallthru
      _
    %241 = vsyncpa [#allocation3], 1
    %242 = vsyncpa [#allocation6], 1
    %243 = vsyncpa [#allocation4], 1

</llo_original>
